<compile_context>
chip_gen: v6e
topology: v6e:2x2x1
jax: 0.10.0
libtpu: 0.0.40
codegen_flags: <defaults>
</compile_context>

<pallas_src>
import jax
import jax.numpy as jnp
from jax.experimental import pallas as pl
from jax.experimental.pallas import tpu as pltpu


def _make_conv1x1_kernel(c_in, use_vpu):
    def kernel(x_ref, w_ref, b_ref, o_ref):
        # x_ref: (C_in, T)   spatial-lane-dense tile of one sample
        # w_ref: (C_out, C_in) full weight
        # b_ref: (C_out, 1)
        # o_ref: (C_out, T)
        x = x_ref[...]
        w = w_ref[...]
        if use_vpu:
            # Tiny channel count: MXU would run a (C_out, C_in) @ (C_in, T) matmul
            # at <2% utilization; do the contraction as C_in VPU multiply-adds
            # with the spatial dim on the lane axis instead.
            acc = w[:, 0:1].astype(jnp.float32) * x[0:1, :].astype(jnp.float32)
            for ci in range(1, c_in):
                acc = acc + (w[:, ci:ci + 1].astype(jnp.float32)
                             * x[ci:ci + 1, :].astype(jnp.float32))
        else:
            acc = jnp.dot(w, x, preferred_element_type=jnp.float32)
        # Bias added once per tile in f32 before the cast (no per-inner-loop broadcast).
        o_ref[...] = (acc + b_ref[...]).astype(o_ref.dtype)

    return kernel


def unconditional_conv(x_nchw, weight, bias, *, max_tile=2048, vpu_channel_threshold=16):
    """1x1 conv forward matching nn.Conv2d(C, C, 1, 1).

    x_nchw: (N, C, H, W) float32
    weight: (C_out, C_in, 1, 1) float32
    bias:   (C_out,) float32
    returns (N, C_out, H, W) float32
    """
    N, C, H, W = x_nchw.shape
    C_out = weight.shape[0]
    S = H * W

    x3 = x_nchw.reshape(N, C, S)
    w_mat = weight.reshape(C_out, C)
    b_col = bias.reshape(C_out, 1)

    # Spatial tile: lane-dense (multiple of 128), capped so a block stays ~<=4 MiB
    # (double-buffered in+out blocks stay well under the scoped VMEM limit on all
    # generations, including v7x's smaller VMEM). If the whole spatial extent fits
    # in one block, use it directly (full-extent blocks are exempt from the 128 rule).
    cap = max(128, min(max_tile, ((4 << 20) // (4 * max(C, C_out))) // 128 * 128))
    if S <= cap:
        tile, s_pad = S, S
    else:
        tile = cap
        s_pad = pl.cdiv(S, tile) * tile
        if s_pad != S:
            x3 = jnp.pad(x3, ((0, 0), (0, 0), (0, s_pad - S)))

    grid = (N, s_pad // tile)
    kernel = _make_conv1x1_kernel(C, use_vpu=(C <= vpu_channel_threshold))

    out3 = pl.pallas_call(
        kernel,
        out_shape=jax.ShapeDtypeStruct((N, C_out, s_pad), x_nchw.dtype),
        grid_spec=pltpu.PrefetchScalarGridSpec(
            num_scalar_prefetch=0,
            grid=grid,
            in_specs=[
                pl.BlockSpec((None, C, tile), lambda n, s: (n, 0, s)),
                pl.BlockSpec((C_out, C), lambda n, s: (0, 0)),
                pl.BlockSpec((C_out, 1), lambda n, s: (0, 0)),
            ],
            out_specs=pl.BlockSpec((None, C_out, tile), lambda n, s: (n, 0, s)),
        ),
        compiler_params=pltpu.CompilerParams(
            dimension_semantics=("parallel", "parallel")),
        cost_estimate=pl.CostEstimate(
            flops=2 * N * s_pad * C * C_out,
            transcendentals=0,
            bytes_accessed=4 * (N * C * s_pad + C * C_out + C_out + N * C_out * s_pad),
        ),
    )(x3, w_mat, b_col)

    if s_pad != S:
        out3 = out3[:, :, :S]
    return out3.reshape(N, C_out, H, W)


if __name__ == "__main__":
    key = jax.random.PRNGKey(0)
    kx, kw, kb = jax.random.split(key, 3)

    N, C, Hs, Ws = 2, 4, 16, 16
    x = jax.random.normal(kx, (N, C, Hs, Ws), dtype=jnp.float32)

    # Deterministic parameter init (shapes from nn.Conv2d(C, C, 1, 1)).
    fan_in = C * 1 * 1
    bound = 1.0 / (fan_in ** 0.5)
    weight = jax.random.uniform(kw, (C, C, 1, 1), jnp.float32, -bound, bound)
    bias = jax.random.uniform(kb, (C,), jnp.float32, -bound, bound)

    out = unconditional_conv(x, weight, bias)
    out = jax.block_until_ready(out)

    # Reference check in plain JAX (same math as conv1x1).
    ref = jnp.einsum("nchw,oc->nohw", x, weight.reshape(C, C)) + bias[None, :, None, None]
    assert out.shape == (N, C, Hs, Ws)
    assert jnp.allclose(out, ref, atol=1e-5, rtol=1e-5)

    print("KERNEL_OK")
</pallas_src>

<mosaic_0001>
module attributes {stable_mosaic.version = 11 : i64} {
  func.func @kernel(%arg0: i32, %arg1: i32, %arg2: memref<1x4x256xf32, #tpu.memory_space<vmem>>, %arg3: memref<4x4xf32, #tpu.memory_space<vmem>>, %arg4: memref<4x1xf32, #tpu.memory_space<vmem>>, %arg5: memref<1x4x256xf32, #tpu.memory_space<vmem>>) attributes {dimension_semantics = [#tpu.dimension_semantics<parallel>, #tpu.dimension_semantics<parallel>], iteration_bounds = array<i64: 2, 1>, scalar_prefetch = 0 : i64, scratch_operands = 0 : i64, tpu.core_type = #tpu.core_type<tc>, window_params = [{transform_indices = @transform_0, window_bounds = array<i64: 1, 4, 256>}, {pipeline_mode = #tpu.pipeline_mode<synchronous>, transform_indices = @transform_1, window_bounds = array<i64: 4, 4>}, {pipeline_mode = #tpu.pipeline_mode<synchronous>, transform_indices = @transform_2, window_bounds = array<i64: 4, 1>}, {transform_indices = @transform_3, window_bounds = array<i64: 1, 4, 256>}]} {
    %c0 = arith.constant 0 : index
    %c0_0 = arith.constant 0 : index
    %c0_1 = arith.constant 0 : index
    %0 = vector.load %arg2[%c0, %c0_0, %c0_1] : memref<1x4x256xf32, #tpu.memory_space<vmem>>, vector<1x4x256xf32>
    %1 = vector.shape_cast %0 : vector<1x4x256xf32> to vector<4x256xf32>
    %c0_2 = arith.constant 0 : index
    %c0_3 = arith.constant 0 : index
    %2 = vector.load %arg3[%c0_2, %c0_3] : memref<4x4xf32, #tpu.memory_space<vmem>>, vector<4x4xf32>
    %3 = vector.extract_strided_slice %2 {offsets = [0, 0], sizes = [4, 1], strides = [1, 1]} : vector<4x4xf32> to vector<4x1xf32>
    %4 = vector.extract_strided_slice %1 {offsets = [0, 0], sizes = [1, 256], strides = [1, 1]} : vector<4x256xf32> to vector<1x256xf32>
    %5 = vector.broadcast %3 : vector<4x1xf32> to vector<4x256xf32>
    %6 = vector.broadcast %4 : vector<1x256xf32> to vector<4x256xf32>
    %7 = arith.mulf %5, %6 : vector<4x256xf32>
    %8 = vector.extract_strided_slice %2 {offsets = [0, 1], sizes = [4, 1], strides = [1, 1]} : vector<4x4xf32> to vector<4x1xf32>
    %9 = vector.extract_strided_slice %1 {offsets = [1, 0], sizes = [1, 256], strides = [1, 1]} : vector<4x256xf32> to vector<1x256xf32>
    %10 = vector.broadcast %8 : vector<4x1xf32> to vector<4x256xf32>
    %11 = vector.broadcast %9 : vector<1x256xf32> to vector<4x256xf32>
    %12 = arith.mulf %10, %11 : vector<4x256xf32>
    %13 = arith.addf %7, %12 : vector<4x256xf32>
    %14 = vector.extract_strided_slice %2 {offsets = [0, 2], sizes = [4, 1], strides = [1, 1]} : vector<4x4xf32> to vector<4x1xf32>
    %15 = vector.extract_strided_slice %1 {offsets = [2, 0], sizes = [1, 256], strides = [1, 1]} : vector<4x256xf32> to vector<1x256xf32>
    %16 = vector.broadcast %14 : vector<4x1xf32> to vector<4x256xf32>
    %17 = vector.broadcast %15 : vector<1x256xf32> to vector<4x256xf32>
    %18 = arith.mulf %16, %17 : vector<4x256xf32>
    %19 = arith.addf %13, %18 : vector<4x256xf32>
    %20 = vector.extract_strided_slice %2 {offsets = [0, 3], sizes = [4, 1], strides = [1, 1]} : vector<4x4xf32> to vector<4x1xf32>
    %21 = vector.extract_strided_slice %1 {offsets = [3, 0], sizes = [1, 256], strides = [1, 1]} : vector<4x256xf32> to vector<1x256xf32>
    %22 = vector.broadcast %20 : vector<4x1xf32> to vector<4x256xf32>
    %23 = vector.broadcast %21 : vector<1x256xf32> to vector<4x256xf32>
    %24 = arith.mulf %22, %23 : vector<4x256xf32>
    %25 = arith.addf %19, %24 : vector<4x256xf32>
    %c0_4 = arith.constant 0 : index
    %c0_5 = arith.constant 0 : index
    %26 = vector.load %arg4[%c0_4, %c0_5] : memref<4x1xf32, #tpu.memory_space<vmem>>, vector<4x1xf32>
    %27 = vector.broadcast %26 : vector<4x1xf32> to vector<4x256xf32>
    %28 = arith.addf %25, %27 : vector<4x256xf32>
    %c0_6 = arith.constant 0 : index
    %c0_7 = arith.constant 0 : index
    %c0_8 = arith.constant 0 : index
    %29 = vector.load %arg5[%c0_6, %c0_7, %c0_8] : memref<1x4x256xf32, #tpu.memory_space<vmem>>, vector<1x4x256xf32>
    %30 = vector.shape_cast %29 : vector<1x4x256xf32> to vector<4x256xf32>
    %31 = vector.shape_cast %28 : vector<4x256xf32> to vector<1x4x256xf32>
    tpu.vector_store %arg5[%c0_6, %c0_7, %c0_8], %31 {strides = array<i32>} : memref<1x4x256xf32, #tpu.memory_space<vmem>>, vector<1x4x256xf32>,
    return
  }
  func.func @transform_0(%arg0: i32, %arg1: i32) -> (i32, i32, i32) {
    %c0_i32 = arith.constant 0 : i32
    %c0_i32_0 = arith.constant 0 : i32
    return %arg0, %c0_i32, %arg1 : i32, i32, i32
  }
  func.func @transform_1(%arg0: i32, %arg1: i32) -> (i32, i32) {
    %c0_i32 = arith.constant 0 : i32
    %c0_i32_0 = arith.constant 0 : i32
    %c0_i32_1 = arith.constant 0 : i32
    return %c0_i32, %c0_i32_0 : i32, i32
  }
  func.func @transform_2(%arg0: i32, %arg1: i32) -> (i32, i32) {
    %c0_i32 = arith.constant 0 : i32
    %c0_i32_0 = arith.constant 0 : i32
    %c0_i32_1 = arith.constant 0 : i32
    return %c0_i32, %c0_i32_0 : i32, i32
  }
  func.func @transform_3(%arg0: i32, %arg1: i32) -> (i32, i32, i32) {
    %c0_i32 = arith.constant 0 : i32
    %c0_i32_0 = arith.constant 0 : i32
    return %arg0, %c0_i32, %arg1 : i32, i32, i32
  }
}

</mosaic_0001>

<llo_original>
// kernel: tpu_custom_call.1
$region0: #{tpu_custom_call.1}
  #allocation0 [shape = 'u32[]', space=smem, size = 0x4, offset = 0x4, fixed_abs, tag = 'smem constant byte address 0x4 - core index']
  #allocation1 [shape = 'u32[144,128]{1,0:T(1,128)}', space=vmem, size = 0x12000, scoped, tag = 'internal scratch']
  %s0 = inlined_call_operand.hbm [shape: f32[2,4,256], index: 0, kind: input, shape index: {}]
  %s1 = inlined_call_operand.vmem [shape: f32[4,4], index: 1, kind: input, shape index: {}]
  %s2 = inlined_call_operand.vmem [shape: f32[4,1], index: 2, kind: input, shape index: {}]
  %s3 = inlined_call_operand.hbm [shape: f32[2,4,256], index: 3, kind: output, shape index: {}]
  %s4 = sld [smem:[#allocation0]]
  $region49: #{tpu_custom_call.1} parent=0
    _
  %s6 = ssub.s32 1, %s4
  %s7 = scalar_select 0, %s6, %s4
  $region1: #{tpu_custom_call.1} parent=0
    #allocation2 [shape = 'u8[8192]{0}', space=vmem, size = 0x2000, scoped, tag = 'input window, operand 0']
    #allocation3 [shape = 's32[2]{0}', space=sflag, size = 0x8, scoped, tag = 'scoped memory for tpu_custom_call.1']
    #allocation4 [shape = 's32[2]{0}', space=sflag, size = 0x8, scoped, tag = 'scoped memory for tpu_custom_call.1']
    #allocation5 [shape = 'u8[8192]{0}', space=vmem, size = 0x2000, scoped, tag = 'output window, operand 0']
    %8 = vsyncpa [#allocation3], 0
    %s9 = scalar_lea.sflag [#allocation3], 1
    %10 = vsyncpa %s9, 0
    %11 = vsyncpa [#allocation4], 0
    %s12 = scalar_lea.sflag [#allocation4], 1
    %13 = vsyncpa %s12, 0
    loop: start=0, step=1, limit=4
    $region2: #{tpu_custom_call.1} parent=1 // loop_pre_header
      _
    $region3: #{tpu_custom_call.1} parent=1 // loop_header
      %s15 = sphi 0, %s19
      %p16 = scmp.ge.s32.totalorder %s15, 4
      %s22 = sphi 0, %s34
      %s23 = sphi 0, %s30
      %s24 = sphi 0, %s22
      %s25 = sphi 0, %s23
      %s26 = sphi 0, %s24
      %s27 = sphi 0, %s25
      %s39 = sphi 0, %s41
      %s42 = sphi 0, %s39
      %s43 = sphi 0, %s42
      %s59 = sphi 0, %s43
      %s63 = sphi 0, %s63
      %s65 = sphi 0, %s63
      %s66 = sphi 0, %s65
      %s80 = sphi 0, %s66
      %s84 = sphi 0, %s84
      %s86 = sphi 0, %s84
      %s87 = sphi 0, %s86
      %s101 = sphi 0, %s87
      %s109 = sphi 0, %s111
      %s112 = sphi 0, %s109
      %s113 = sphi 0, %s112
      %s129 = sphi 0, %s113
    $region4: #{tpu_custom_call.1} parent=1 // loop_header_branch
      %18 = sbr.rel (%p16) target = $region8
    $region5: #{tpu_custom_call.1} parent=1 // loop_body
      %s20 = ssub.s32 %s15, 1
      %s21 = ssub.s32 %s15, 2
      %s28 = sadd.s32 1, %s23
      %p29 = scmp.ge.s32.totalorder %s28, 1
      %s30 = scalar_select %p29, 0, %s28
      %s31 = sadd.s32 1, %s22
      %s32 = scalar_select %p29, %s31, %s22
      %p33 = scmp.ge.s32.totalorder %s32, 2
      %s34 = scalar_select %p33, 0, %s32
      %s35 = ssub.s32 %s22, %s34
      %s36 = ssub.s32 %s23, %s30
      %s37 = sor.u32 %s35, %s36
      %p38 = scmp.eq.s32.totalorder %s37, 0
      %s40 = sadd.s32 %s39, 1
      %s41 = scalar_select %p38, %s39, %s40
      %p44 = pneg %p38
      %p45 = scmp.eq.s32.totalorder %s15, 1
      %p46 = por %p44, %p45
      %p47 = scmp.ne.s32.totalorder %s39, %s42
      %p48 = scmp.eq.s32.totalorder %s15, 0
      %p49 = por %p47, %p48
      %p50 = scmp.ne.s32.totalorder %s39, %s42
      %p51 = scmp.eq.s32.totalorder %s20, 1
      %p52 = por %p50, %p51
      %p53 = scmp.ne.s32.totalorder %s42, %s43
      %p54 = scmp.eq.s32.totalorder %s20, 0
      %p55 = por %p53, %p54
      %p56 = scmp.ne.s32.totalorder %s42, %s43
      %p57 = scmp.eq.s32.totalorder %s21, 1
      %p58 = por %p56, %p57
      %p60 = scmp.ne.s32.totalorder %s43, %s59
      %p61 = scmp.eq.s32.totalorder %s21, 0
      %p62 = por %p60, %p61
      %s64 = sadd.s32 %s63, 1
      %p67 = scmp.eq.s32.totalorder %s15, 1
      %p68 = scmp.ne.s32.totalorder %s63, %s65
      %p69 = scmp.eq.s32.totalorder %s15, 0
      %p70 = por %p68, %p69
      %p71 = scmp.ne.s32.totalorder %s63, %s65
      %p72 = scmp.eq.s32.totalorder %s20, 1
      %p73 = por %p71, %p72
      %p74 = scmp.ne.s32.totalorder %s65, %s66
      %p75 = scmp.eq.s32.totalorder %s20, 0
      %p76 = por %p74, %p75
      %p77 = scmp.ne.s32.totalorder %s65, %s66
      %p78 = scmp.eq.s32.totalorder %s21, 1
      %p79 = por %p77, %p78
      %p81 = scmp.ne.s32.totalorder %s66, %s80
      %p82 = scmp.eq.s32.totalorder %s21, 0
      %p83 = por %p81, %p82
      %s85 = sadd.s32 %s84, 1
      %p88 = scmp.eq.s32.totalorder %s15, 1
      %p89 = scmp.ne.s32.totalorder %s84, %s86
      %p90 = scmp.eq.s32.totalorder %s15, 0
      %p91 = por %p89, %p90
      %p92 = scmp.ne.s32.totalorder %s84, %s86
      %p93 = scmp.eq.s32.totalorder %s20, 1
      %p94 = por %p92, %p93
      %p95 = scmp.ne.s32.totalorder %s86, %s87
      %p96 = scmp.eq.s32.totalorder %s20, 0
      %p97 = por %p95, %p96
      %p98 = scmp.ne.s32.totalorder %s86, %s87
      %p99 = scmp.eq.s32.totalorder %s21, 1
      %p100 = por %p98, %p99
      %p102 = scmp.ne.s32.totalorder %s87, %s101
      %p103 = scmp.eq.s32.totalorder %s21, 0
      %p104 = por %p102, %p103
      %s105 = ssub.s32 %s22, %s34
      %s106 = ssub.s32 %s23, %s30
      %s107 = sor.u32 %s105, %s106
      %p108 = scmp.eq.s32.totalorder %s107, 0
      %s110 = sadd.s32 %s109, 1
      %s111 = scalar_select %p108, %s109, %s110
      %p114 = pneg %p108
      %p115 = scmp.eq.s32.totalorder %s15, 1
      %p116 = por %p114, %p115
      %p117 = scmp.ne.s32.totalorder %s109, %s112
      %p118 = scmp.eq.s32.totalorder %s15, 0
      %p119 = por %p117, %p118
      %p120 = scmp.ne.s32.totalorder %s109, %s112
      %p121 = scmp.eq.s32.totalorder %s20, 1
      %p122 = por %p120, %p121
      %p123 = scmp.ne.s32.totalorder %s112, %s113
      %p124 = scmp.eq.s32.totalorder %s20, 0
      %p125 = por %p123, %p124
      %p126 = scmp.ne.s32.totalorder %s112, %s113
      %p127 = scmp.eq.s32.totalorder %s21, 1
      %p128 = por %p126, %p127
      %p130 = scmp.ne.s32.totalorder %s113, %s129
      %p131 = scmp.eq.s32.totalorder %s21, 0
      %p132 = por %p130, %p131
      %p133 = scmp.le.s32.totalorder 1, %s15
      %p134 = scmp.lt.s32.totalorder %s15, 3
      %p135 = pnand %p133, %p134
      %p136 = pneg %p135
      // Predicated region
      $region9: #{tpu_custom_call.1} parent=5 // pred_check
        _
      $region10: #{tpu_custom_call.1} parent=5 // pred_check_branch
        %138 = sbr.rel (%p135) target = $region12
      $region11: #{tpu_custom_call.1} parent=5 // pred_region
        %s139 = ssub.s32 %s15, 1
        // Predicated region
        $region13: #{tpu_custom_call.1} parent=11 // pred_check
          %p140 = pneg %p76
        $region14: #{tpu_custom_call.1} parent=11 // pred_check_branch
          %142 = sbr.rel (%p140) target = $region16
        $region15: #{tpu_custom_call.1} parent=11 // pred_region
          _
        $region16: #{tpu_custom_call.1} parent=11 // pred_fallthru
          _
        // Predicated region
        $region17: #{tpu_custom_call.1} parent=11 // pred_check
          %p143 = pneg %p97
        $region18: #{tpu_custom_call.1} parent=11 // pred_check_branch
          %145 = sbr.rel (%p143) target = $region20
        $region19: #{tpu_custom_call.1} parent=11 // pred_region
          _
        $region20: #{tpu_custom_call.1} parent=11 // pred_fallthru
          _
      $region12: #{tpu_custom_call.1} parent=5 // pred_fallthru
        _
      %p146 = scmp.lt.s32.totalorder %s15, 2
      // Predicated region
      $region21: #{tpu_custom_call.1} parent=5 // pred_check
        %p147 = pneg %p146
      $region22: #{tpu_custom_call.1} parent=5 // pred_check_branch
        %149 = sbr.rel (%p147) target = $region24
      $region23: #{tpu_custom_call.1} parent=5 // pred_region
        // Predicated region
        $region25: #{tpu_custom_call.1} parent=23 // pred_check
          %p150 = pneg %p49
        $region26: #{tpu_custom_call.1} parent=23 // pred_check_branch
          %152 = sbr.rel (%p150) target = $region28
        $region27: #{tpu_custom_call.1} parent=23 // pred_region
          %s153 = sand.u32 %s39, 1
          %s154 = scalar_lea.sflag [#allocation3], %s153
          %s155 = sand.u32 %s39, 1
          %s156 = smul.addr %s155, 8
          %s157 = scalar_lea.vmem [#allocation2], %s156
          %s158 = smul.u32 2, %s23
          %s160 = ssub.s32 128, 128
          %161 = vsyncadd %s154, %s160
          %s162 = smul.addr %s22, 2
          %s163 = sadd.s32 %s158, %s162
          %s164 = smul.addr %s163, 64
          %s165 = scalar_lea.hbm %s0, %s164
          %s167 = sshll.u32 %s157, 4
          %s168 = int_to_ptr.vmem [resolvable:$true] %s167
          %170 = dma.hbm_to_vmem [thread:$0]  %s165, 128, %s168, %s154
        $region28: #{tpu_custom_call.1} parent=23 // pred_fallthru
          _
      $region24: #{tpu_custom_call.1} parent=5 // pred_fallthru
        _
      %p171 = scmp.le.s32.totalorder 1, %s15
      %p172 = scmp.lt.s32.totalorder %s15, 3
      %p173 = pnand %p171, %p172
      %p174 = pneg %p173
      // Predicated region
      $region29: #{tpu_custom_call.1} parent=5 // pred_check
        _
      $region30: #{tpu_custom_call.1} parent=5 // pred_check_branch
        %176 = sbr.rel (%p173) target = $region32
      $region31: #{tpu_custom_call.1} parent=5 // pred_region
        %s177 = ssub.s32 %s15, 1
        %s178 = sand.u32 %s42, 1
        %s179 = scalar_lea.sflag [#allocation3], %s178
        %s180 = sand.u32 %s42, 1
        %s181 = smul.addr %s180, 8
        %s182 = scalar_lea.vmem [#allocation2], %s181
        // Predicated region
        $region33: #{tpu_custom_call.1} parent=31 // pred_check
          %p183 = pneg %p55
        $region34: #{tpu_custom_call.1} parent=31 // pred_check_branch
          %185 = sbr.rel (%p183) target = $region36
        $region35: #{tpu_custom_call.1} parent=31 // pred_region
          %186 = dma.done %s179, 128
        $region36: #{tpu_custom_call.1} parent=31 // pred_fallthru
          _
        %s187 = sand.u32 %s42, 1
        %s188 = scalar_lea.sflag [#allocation3], %s187
        %s189 = sand.u32 %s42, 1
        %s190 = smul.addr %s189, 8
        %s191 = scalar_lea.vmem [#allocation2], %s190
        %p192 = pneg %p55
        %p193 = pneg %p52
        %p194 = pneg %p76
        %p195 = pneg %p73
        %p196 = pneg %p97
        %p197 = pneg %p94
        %p198 = pneg %p125
        %p199 = pneg %p122
        %s200 = sand.u32 %s112, 1
        %s201 = scalar_lea.sflag [#allocation4], %s200
        %s202 = sand.u32 %s112, 1
        %s203 = smul.addr %s202, 8
        %s204 = scalar_lea.vmem [#allocation5], %s203
        %s205 = smul.u32 2, %s25
        %s206 = smul.u32 2, %s25
        %v207 = vld [vmem:[%s182] sm:$0xff]
        %v208 = vld [vmem:[%s1] sm:$0xf]
        %210 = vset.pattern.permute.xlu0 0
        %211 = vperm.xlu0 %210, %v208
        %v212 = vpop.permute.xlu0 %211
        %v215 = vlaneseq
        %v216 = vshrl.u32 %v215, 7
        %v217 = vsub.s32 0, %v216
        %v218 = vrot.slane %v207, %v217
        %v219 = vlaneseq
        %v220 = vshrl.u32 %v219, 7
        %v221 = vsub.s32 4, %v220
        %v222 = vrot.slane %v207, %v221
        %v225 = vlaneseq
        %v226 = vshrl.u32 %v225, 7
        %v227 = vsub.s32 0, %v226
        %v228 = vrot.slane %v218, %v227
        %v229 = vlaneseq
        %v230 = vshrl.u32 %v229, 7
        %v231 = vsub.s32 0, %v230
        %v232 = vrot.slane %v222, %v231
        %v233 = vmul.f32 %v212, %v228
        %v234 = vmul.f32 %v212, %v232
        %235 = vset.pattern.permute.xlu0 1
        %236 = vperm.xlu0 %235, %v208
        %v237 = vpop.permute.xlu0 %236
        %v239 = vlaneseq
        %v240 = vshrl.u32 %v239, 7
        %v241 = vsub.s32 1, %v240
        %v242 = vrot.slane %v207, %v241
        %v243 = vlaneseq
        %v244 = vshrl.u32 %v243, 7
        %v245 = vsub.s32 5, %v244
        %v246 = vrot.slane %v207, %v245
        %v249 = vlaneseq
        %v250 = vshrl.u32 %v249, 7
        %v251 = vsub.s32 1, %v250
        %v252 = vrot.slane %v242, %v251
        %v253 = vlaneseq
        %v254 = vshrl.u32 %v253, 7
        %v255 = vsub.s32 1, %v254
        %v256 = vrot.slane %v246, %v255
        %v257 = vmul.f32 %v237, %v252
        %v258 = vmul.f32 %v237, %v256
        %v259 = vadd.f32 %v233, %v257
        %v260 = vadd.f32 %v234, %v258
        %261 = vset.pattern.permute.xlu0 2
        %262 = vperm.xlu0 %261, %v208
        %v263 = vpop.permute.xlu0 %262
        %v265 = vlaneseq
        %v266 = vshrl.u32 %v265, 7
        %v267 = vsub.s32 2, %v266
        %v268 = vrot.slane %v207, %v267
        %v269 = vlaneseq
        %v270 = vshrl.u32 %v269, 7
        %v271 = vsub.s32 6, %v270
        %v272 = vrot.slane %v207, %v271
        %v275 = vlaneseq
        %v276 = vshrl.u32 %v275, 7
        %v277 = vsub.s32 2, %v276
        %v278 = vrot.slane %v268, %v277
        %v279 = vlaneseq
        %v280 = vshrl.u32 %v279, 7
        %v281 = vsub.s32 2, %v280
        %v282 = vrot.slane %v272, %v281
        %v283 = vmul.f32 %v263, %v278
        %v284 = vmul.f32 %v263, %v282
        %v285 = vadd.f32 %v259, %v283
        %v286 = vadd.f32 %v260, %v284
        %287 = vset.pattern.permute.xlu0 3
        %288 = vperm.xlu0 %287, %v208
        %v289 = vpop.permute.xlu0 %288
        %v291 = vlaneseq
        %v292 = vshrl.u32 %v291, 7
        %v293 = vsub.s32 3, %v292
        %v294 = vrot.slane %v207, %v293
        %v295 = vlaneseq
        %v296 = vshrl.u32 %v295, 7
        %v297 = vsub.s32 7, %v296
        %v298 = vrot.slane %v207, %v297
        %v301 = vlaneseq
        %v302 = vshrl.u32 %v301, 7
        %v303 = vsub.s32 3, %v302
        %v304 = vrot.slane %v294, %v303
        %v305 = vlaneseq
        %v306 = vshrl.u32 %v305, 7
        %v307 = vsub.s32 3, %v306
        %v308 = vrot.slane %v298, %v307
        %v309 = vmul.f32 %v289, %v304
        %v310 = vmul.f32 %v289, %v308
        %v311 = vadd.f32 %v285, %v309
        %v312 = vadd.f32 %v286, %v310
        %v313 = vld [vmem:[%s2] sm:$0xf]
        %315 = vset.pattern.permute.xlu0 0
        %316 = vperm.xlu0 %315, %v313
        %v317 = vpop.permute.xlu0 %316
        %v319 = vadd.f32 %v311, %v317
        %v320 = vadd.f32 %v312, %v317
        %v323 = vcombine.low %v319, %v320
        %325 = vst [vmem:[%s204] sm:$0xff] %v323
        %s326 = sand.u32 %s112, 1
        %s327 = scalar_lea.sflag [#allocation4], %s326
        %s328 = sand.u32 %s112, 1
        %s329 = smul.addr %s328, 8
        %s330 = scalar_lea.vmem [#allocation5], %s329
        // Predicated region
        $region37: #{tpu_custom_call.1} parent=31 // pred_check
          %p331 = pneg %p122
        $region38: #{tpu_custom_call.1} parent=31 // pred_check_branch
          %333 = sbr.rel (%p331) target = $region40
        $region39: #{tpu_custom_call.1} parent=31 // pred_region
          %s334 = smul.u32 2, %s25
          %s336 = ssub.s32 128, 128
          %337 = vsyncadd %s327, %s336
          %s338 = smul.addr %s24, 2
          %s339 = sadd.s32 %s334, %s338
          %s340 = smul.addr %s339, 64
          %s341 = scalar_lea.hbm %s3, %s340
          %s343 = sshll.u32 %s330, 4
          %s344 = int_to_ptr.vmem [resolvable:$true] %s343
          %346 = dma.vmem_to_hbm [thread:$0]  %s344, 128, %s341, %s327
        $region40: #{tpu_custom_call.1} parent=31 // pred_fallthru
          _
      $region32: #{tpu_custom_call.1} parent=5 // pred_fallthru
        _
      %p347 = scmp.le.s32.totalorder 2, %s15
      // Predicated region
      $region41: #{tpu_custom_call.1} parent=5 // pred_check
        %p348 = pneg %p347
      $region42: #{tpu_custom_call.1} parent=5 // pred_check_branch
        %350 = sbr.rel (%p348) target = $region44
      $region43: #{tpu_custom_call.1} parent=5 // pred_region
        %s351 = ssub.s32 %s15, 2
        // Predicated region
        $region45: #{tpu_custom_call.1} parent=43 // pred_check
          %p352 = pneg %p128
        $region46: #{tpu_custom_call.1} parent=43 // pred_check_branch
          %354 = sbr.rel (%p352) target = $region48
        $region47: #{tpu_custom_call.1} parent=43 // pred_region
          %s355 = sand.u32 %s113, 1
          %s356 = scalar_lea.sflag [#allocation4], %s355
          %s357 = sand.u32 %s113, 1
          %s358 = smul.addr %s357, 8
          %s359 = scalar_lea.vmem [#allocation5], %s358
          %360 = dma.done %s356, 128
        $region48: #{tpu_custom_call.1} parent=43 // pred_fallthru
          _
      $region44: #{tpu_custom_call.1} parent=5 // pred_fallthru
        _
    $region6: #{tpu_custom_call.1} parent=1 // loop_footer
      %s19 = sadd.s32 1, %s15
    $region7: #{tpu_custom_call.1} parent=1 // loop_footer_branch
      %14 = sbr.rel target = $region3
    $region8: #{tpu_custom_call.1} parent=1 // loop_exit
      _
    %361 = vsyncpa [#allocation3], 1
    %s362 = scalar_lea.sflag [#allocation3], 1
    %363 = vsyncpa %s362, 1
    %364 = vsyncpa [#allocation4], 1
    %s365 = scalar_lea.sflag [#allocation4], 1
    %366 = vsyncpa %s365, 1

</llo_original>
